<compile_context>
chip_gen: v7x
topology: tpu7x:2x2x1
jax: 0.10.0
libtpu: 0.0.40
codegen_flags: <defaults>
</compile_context>

<pallas_src>
import functools

import jax
import jax.numpy as jnp
from jax.experimental import pallas as pl
from jax.experimental.pallas import tpu as pltpu


def _round_up(v, m):
    return ((v + m - 1) // m) * m


def _dims(C, P, D, NP, max_tile=512):
    """Padded / tiled sizes shared by param prep and the forward pass."""
    K = C * P * P
    S = NP + 1                                  # cls row + patch rows
    K_pad = _round_up(K, 128)                   # lane-dense contraction dim
    D_pad = _round_up(D, 128)                   # lane-dense output dim
    S_tile = min(max_tile, _round_up(S, 16))    # 16-aligned (bf16 sublanes)
    S_pad = _round_up(S, S_tile)
    return K, K_pad, D_pad, S, S_tile, S_pad


def patch_proj_kernel(patches_ref, wt_ref, add_ref, out_ref):
    # patches_ref: (S_tile, K_pad) bf16   wt_ref:  (K_pad, D_pad) bf16
    # add_ref:     (S_tile, D_pad) bf16   out_ref: (S_tile, D_pad) bf16
    acc = jnp.dot(
        patches_ref[...], wt_ref[...], preferred_element_type=jnp.float32
    )
    out_ref[...] = (acc + add_ref[...].astype(jnp.float32)).astype(out_ref.dtype)


def prepare_patch_embedding_params(proj_w, proj_b, cls_token, pos_embed):
    """One-time (parameter-load-time) preprocessing of the module params."""
    D, C, P, _ = proj_w.shape
    NP = pos_embed.shape[1] - 1
    K, K_pad, D_pad, S, S_tile, S_pad = _dims(C, P, D, NP)

    # Conv2d weight (D, C, P, P) -> (K, D), padded lane-dense, bf16 MXU input.
    wt = proj_w.reshape(D, K).T                                    # (K, D)
    wt_p = jnp.pad(wt, ((0, K_pad - K), (0, D_pad - D))).astype(jnp.bfloat16)

    # Per-row add table (batch-invariant): row 0 = cls_token + pos[0] (the cls
    # row is produced in-kernel by an all-zero patch row), rows 1.. = bias +
    # pos[1:].  Stored bf16; padding rows/cols are zero.
    pos = pos_embed.reshape(S, D)
    add = jnp.concatenate(
        [cls_token.reshape(1, D) + pos[:1], proj_b[None, :] + pos[1:]], axis=0
    )                                                              # (S, D) f32
    add_p = jnp.pad(add, ((0, S_pad - S), (0, D_pad - D))).astype(jnp.bfloat16)
    return wt_p, add_p


@functools.partial(jax.jit, static_argnames=("patch_size", "embed_dim"))
def patch_embedding_forward(x, wt_p, add_p, *, patch_size, embed_dim):
    """x: (B, C, H, W) float32 NCHW. Returns (B, NP+1, D) bfloat16.

    Output is bf16 (accuracy already bounded by bf16 MXU inputs); downstream
    consumers that require f32 can cast.
    """
    B, C, H, W = x.shape
    P = patch_size
    D = embed_dim
    nph, npw = H // P, W // P
    NP = nph * npw
    K, K_pad, D_pad, S, S_tile, S_pad = _dims(C, P, D, NP)
    assert wt_p.shape == (K_pad, D_pad), wt_p.shape
    assert add_p.shape == (S_pad, D_pad), add_p.shape

    # Patch extraction: (B, C, H, W) -> (B, NP, K) in (c, ph, pw) order, bf16.
    # Row 0 of each batch is left zero (becomes the cls row in-kernel);
    # trailing rows/cols are zero padding.  allow_input_fusion lets XLA fuse
    # this transpose/cast/pad chain into the pallas operand read.
    patches = x.astype(jnp.bfloat16).reshape(B, C, nph, P, npw, P)
    patches = patches.transpose(0, 2, 4, 1, 3, 5).reshape(B, NP, K)
    patches_p = jnp.pad(patches, ((0, 0), (1, S_pad - S), (0, K_pad - K)))

    grid = (B, S_pad // S_tile)

    cost = pl.CostEstimate(
        flops=2 * B * S_pad * K_pad * D_pad,
        transcendentals=0,
        bytes_accessed=(
            B * S_pad * K_pad * 2        # patches (bf16)
            + K_pad * D_pad * 2          # weight (bf16, reused across grid)
            + S_pad * D_pad * 2          # add table (bf16, batch-invariant)
            + B * S_pad * D_pad * 2      # output (bf16)
        ),
    )

    # Per-step VMEM (double-buffered) at the 512-row cap and ViT-base dims is
    # ~7 MiB: inside v5e's 16 MiB default scoped limit and far below v7x's
    # 64 MiB physical VMEM, so no vmem_limit_bytes override is needed.
    # (The constant-index weight block could additionally use
    # pipeline_mode=pl.Buffered(1) to drop its redundant second buffer.)
    out = pl.pallas_call(
        patch_proj_kernel,
        out_shape=jax.ShapeDtypeStruct((B, S_pad, D_pad), jnp.bfloat16),
        grid=grid,
        in_specs=[
            pl.BlockSpec((None, S_tile, K_pad), lambda b, j: (b, j, 0)),
            pl.BlockSpec((K_pad, D_pad), lambda b, j: (0, 0)),
            pl.BlockSpec((S_tile, D_pad), lambda b, j: (j, 0)),
        ],
        out_specs=pl.BlockSpec((None, S_tile, D_pad), lambda b, j: (b, j, 0)),
        compiler_params=pltpu.CompilerParams(
            dimension_semantics=("parallel", "parallel"),
            allow_input_fusion=[True, False, False],
        ),
        cost_estimate=cost,
    )(patches_p, wt_p, add_p)

    # Only the padding slice remains as post-processing: the cls row is row 0
    # of the kernel output, so no concatenate is needed.
    return out[:, :S, :D]


def reference_forward(x, proj_w, proj_b, cls_token, pos_embed, patch_size):
    """Pure-JAX f32 reference matching PyTorch semantics (eval mode)."""
    B = x.shape[0]
    y = jax.lax.conv_general_dilated(
        x, proj_w,
        window_strides=(patch_size, patch_size),
        padding="VALID",
        dimension_numbers=("NCHW", "OIHW", "NCHW"),
    ) + proj_b[None, :, None, None]
    D = proj_w.shape[0]
    y = y.reshape(B, D, -1).transpose(0, 2, 1)          # (B, NP, D)
    cls = jnp.broadcast_to(cls_token, (B, 1, D))
    y = jnp.concatenate([cls, y], axis=1) + pos_embed
    return y


if __name__ == "__main__":
    # Small shapes consistent with the module: img_size=16, patch_size=4,
    # in_channels=4, embed_dim=32, batch=2 -> num_patches=16.
    B, C, H, W = 2, 4, 16, 16
    P = 4
    D = 32
    NP = (H // P) * (W // P)

    key = jax.random.PRNGKey(0)
    kx, kw, kb, kcls, kpos = jax.random.split(key, 5)

    x = jax.random.normal(kx, (B, C, H, W), dtype=jnp.float32)
    # Conv2d(in_channels=C, out=D, kernel=P, stride=P) params
    proj_w = jax.random.normal(kw, (D, C, P, P), dtype=jnp.float32) * 0.02
    proj_b = jax.random.normal(kb, (D,), dtype=jnp.float32) * 0.02
    # In the module these init to zeros; use small random values so the
    # add-paths are actually exercised.
    cls_token = jax.random.normal(kcls, (1, 1, D), dtype=jnp.float32) * 0.02
    pos_embed = jax.random.normal(kpos, (1, NP + 1, D), dtype=jnp.float32) * 0.02

    # One-time parameter preprocessing (hoisted out of the hot jitted forward).
    wt_p, add_p = prepare_patch_embedding_params(proj_w, proj_b, cls_token,
                                                 pos_embed)

    out = patch_embedding_forward(x, wt_p, add_p, patch_size=P, embed_dim=D)
    out = jax.block_until_ready(out)

    ref = reference_forward(x, proj_w, proj_b, cls_token, pos_embed, P)
    assert out.shape == (B, NP + 1, D), out.shape
    # bf16 MXU inputs / bf16 output with f32 accumulation -> loosened tolerance.
    assert jnp.allclose(out.astype(jnp.float32), ref, atol=2e-2, rtol=2e-2), \
        float(jnp.max(jnp.abs(out.astype(jnp.float32) - ref)))
    print("KERNEL_OK")
</pallas_src>

<mosaic_0001>
module attributes {stable_mosaic.version = 11 : i64} {
  func.func @patch_proj_kernel(%arg0: i32, %arg1: i32, %arg2: memref<1x32x128xbf16, #tpu.memory_space<vmem>>, %arg3: memref<128x128xbf16, #tpu.memory_space<vmem>>, %arg4: memref<32x128xbf16, #tpu.memory_space<vmem>>, %arg5: memref<1x32x128xbf16, #tpu.memory_space<vmem>>) attributes {dimension_semantics = [#tpu.dimension_semantics<parallel>, #tpu.dimension_semantics<parallel>], iteration_bounds = array<i64: 2, 1>, scalar_prefetch = 0 : i64, scratch_operands = 0 : i64, tpu.core_type = #tpu.core_type<tc>, window_params = [{transform_indices = @transform_0, window_bounds = array<i64: 1, 32, 128>}, {pipeline_mode = #tpu.pipeline_mode<synchronous>, transform_indices = @transform_1, window_bounds = array<i64: 128, 128>}, {transform_indices = @transform_2, window_bounds = array<i64: 32, 128>}, {transform_indices = @transform_3, window_bounds = array<i64: 1, 32, 128>}]} {
    %c0 = arith.constant 0 : index
    %c0_0 = arith.constant 0 : index
    %c0_1 = arith.constant 0 : index
    %0 = vector.load %arg2[%c0, %c0_0, %c0_1] : memref<1x32x128xbf16, #tpu.memory_space<vmem>>, vector<1x32x128xbf16>
    %1 = vector.shape_cast %0 : vector<1x32x128xbf16> to vector<32x128xbf16>
    %c0_2 = arith.constant 0 : index
    %c0_3 = arith.constant 0 : index
    %2 = vector.load %arg3[%c0_2, %c0_3] : memref<128x128xbf16, #tpu.memory_space<vmem>>, vector<128x128xbf16>
    %cst = arith.constant dense<0.000000e+00> : vector<32x128xf32>
    %3 = tpu.matmul %1, %2, %cst {dimension_numbers = #tpu.dot_dimension_numbers<[1], [0], [0], [1], [0, 0, 1, 1], [], []>} : vector<32x128xbf16>, vector<128x128xbf16>, vector<32x128xf32> -> vector<32x128xf32>
    %c0_4 = arith.constant 0 : index
    %c0_5 = arith.constant 0 : index
    %4 = vector.load %arg4[%c0_4, %c0_5] : memref<32x128xbf16, #tpu.memory_space<vmem>>, vector<32x128xbf16>
    %5 = arith.extf %4 : vector<32x128xbf16> to vector<32x128xf32>
    %6 = arith.addf %3, %5 : vector<32x128xf32>
    %7 = arith.truncf %6 : vector<32x128xf32> to vector<32x128xbf16>
    %c0_6 = arith.constant 0 : index
    %c0_7 = arith.constant 0 : index
    %c0_8 = arith.constant 0 : index
    %8 = vector.load %arg5[%c0_6, %c0_7, %c0_8] : memref<1x32x128xbf16, #tpu.memory_space<vmem>>, vector<1x32x128xbf16>
    %9 = vector.shape_cast %8 : vector<1x32x128xbf16> to vector<32x128xbf16>
    %10 = vector.shape_cast %7 : vector<32x128xbf16> to vector<1x32x128xbf16>
    tpu.vector_store %arg5[%c0_6, %c0_7, %c0_8], %10 {strides = array<i32>} : memref<1x32x128xbf16, #tpu.memory_space<vmem>>, vector<1x32x128xbf16>,
    return
  }
  func.func @transform_0(%arg0: i32, %arg1: i32) -> (i32, i32, i32) {
    %c0_i32 = arith.constant 0 : i32
    %c0_i32_0 = arith.constant 0 : i32
    return %arg0, %arg1, %c0_i32 : i32, i32, i32
  }
  func.func @transform_1(%arg0: i32, %arg1: i32) -> (i32, i32) {
    %c0_i32 = arith.constant 0 : i32
    %c0_i32_0 = arith.constant 0 : i32
    %c0_i32_1 = arith.constant 0 : i32
    return %c0_i32, %c0_i32_0 : i32, i32
  }
  func.func @transform_2(%arg0: i32, %arg1: i32) -> (i32, i32) {
    %c0_i32 = arith.constant 0 : i32
    %c0_i32_0 = arith.constant 0 : i32
    return %arg1, %c0_i32 : i32, i32
  }
  func.func @transform_3(%arg0: i32, %arg1: i32) -> (i32, i32, i32) {
    %c0_i32 = arith.constant 0 : i32
    %c0_i32_0 = arith.constant 0 : i32
    return %arg0, %arg1, %c0_i32 : i32, i32, i32
  }
}

</mosaic_0001>

<llo_original>
// kernel: patch_embedding_forward.2
$region0: #{patch_embedding_forward.2}
  #allocation0 [shape = 'u32[]', space=smem, size = 0x4, offset = 0x4, fixed_abs, tag = 'smem constant byte address 0x4 - core index']
  #allocation1 [shape = 'u32[144,128]{1,0:T(1,128)}', space=vmem, size = 0x12000, scoped, tag = 'internal scratch']
  #allocation2 [shape = 'u32[2048]{0}', space=vmem, size = 0x2000, scoped, tag = 'scoped memory for patch_embedding_forward.2']
  #allocation3 [shape = 'u32[2048]{0}', space=vmem, size = 0x2000, scoped, tag = 'scoped memory for patch_embedding_forward.2']
  #allocation4 [shape = 'u32[2048]{0}', space=vmem, size = 0x2000, scoped, tag = 'scoped memory for patch_embedding_forward.2']
  #allocation5 [shape = 'u32[2048]{0}', space=vmem, size = 0x2000, scoped, tag = 'scoped memory for patch_embedding_forward.2']
  #allocation6 [shape = 'u32[2048]{0}', space=vmem, size = 0x2000, scoped, tag = 'scoped memory for patch_embedding_forward.2']
  %s0 = inlined_call_operand.vmem [shape: bf16[128,128], index: 0, kind: input, shape index: {}]
  %s1 = inlined_call_operand.vmem [shape: bf16[32,128], index: 1, kind: input, shape index: {}]
  %s2 = inlined_call_operand.vmem [shape: bf16[2,16,64], index: 2, kind: input, shape index: {}]
  %s3 = inlined_call_operand.<no memory space> [shape: bf16[], index: 3, kind: input, shape index: {}]
  %s4 = inlined_call_operand.vmem [shape: bf16[2,32,128], index: 4, kind: output, shape index: {}]
  %s5 = sld [smem:[#allocation0]]
  $region45: #{patch_embedding_forward.2} parent=0
    _
  %s7 = ssub.s32 1, %s5
  %s8 = scalar_select 0, %s7, %s5
  %v9 = vstv %s3
  %v10 = vunpack.i.l.bf16 %v9
  %v12 = vunpack.i.h.bf16 %v9
  loop: start=0, step=1, limit=4
  $region2: #{patch_embedding_forward.2} parent=0 // loop_pre_header
    _
  $region3: #{patch_embedding_forward.2} parent=0 // loop_header
    %s15 = sphi 0, %s19
    %p16 = scmp.ge.s32.totalorder %s15, 4
    %s22 = sphi 0, %s34
    %s23 = sphi 0, %s30
    %s24 = sphi 0, %s22
    %s25 = sphi 0, %s23
    %s26 = sphi 0, %s24
    %s27 = sphi 0, %s25
    %s39 = sphi 0, %s41
    %s42 = sphi 0, %s39
    %s43 = sphi 0, %s42
    %s59 = sphi 0, %s43
    %s63 = sphi 0, %s63
    %s65 = sphi 0, %s63
    %s66 = sphi 0, %s65
    %s80 = sphi 0, %s66
    %s86 = sphi 0, %s88
    %s89 = sphi 0, %s86
    %s90 = sphi 0, %s89
    %s106 = sphi 0, %s90
    %s114 = sphi 0, %s116
    %s117 = sphi 0, %s114
    %s118 = sphi 0, %s117
    %s134 = sphi 0, %s118
  $region4: #{patch_embedding_forward.2} parent=0 // loop_header_branch
    %18 = sbr.rel (%p16) target = $region8
  $region5: #{patch_embedding_forward.2} parent=0 // loop_body
    %s20 = ssub.s32 %s15, 1
    %s21 = ssub.s32 %s15, 2
    %s28 = sadd.s32 1, %s23
    %p29 = scmp.ge.s32.totalorder %s28, 1
    %s30 = scalar_select %p29, 0, %s28
    %s31 = sadd.s32 1, %s22
    %s32 = scalar_select %p29, %s31, %s22
    %p33 = scmp.ge.s32.totalorder %s32, 2
    %s34 = scalar_select %p33, 0, %s32
    %s35 = ssub.s32 %s22, %s34
    %s36 = ssub.s32 %s23, %s30
    %s37 = sor.u32 %s35, %s36
    %p38 = scmp.eq.s32.totalorder %s37, 0
    %s40 = sadd.s32 %s39, 1
    %s41 = scalar_select %p38, %s39, %s40
    %p44 = pneg %p38
    %p45 = scmp.eq.s32.totalorder %s15, 1
    %p46 = por %p44, %p45
    %p47 = scmp.ne.s32.totalorder %s39, %s42
    %p48 = scmp.eq.s32.totalorder %s15, 0
    %p49 = por %p47, %p48
    %p50 = scmp.ne.s32.totalorder %s39, %s42
    %p51 = scmp.eq.s32.totalorder %s20, 1
    %p52 = por %p50, %p51
    %p53 = scmp.ne.s32.totalorder %s42, %s43
    %p54 = scmp.eq.s32.totalorder %s20, 0
    %p55 = por %p53, %p54
    %p56 = scmp.ne.s32.totalorder %s42, %s43
    %p57 = scmp.eq.s32.totalorder %s21, 1
    %p58 = por %p56, %p57
    %p60 = scmp.ne.s32.totalorder %s43, %s59
    %p61 = scmp.eq.s32.totalorder %s21, 0
    %p62 = por %p60, %p61
    %s64 = sadd.s32 %s63, 1
    %p67 = scmp.eq.s32.totalorder %s15, 1
    %p68 = scmp.ne.s32.totalorder %s63, %s65
    %p69 = scmp.eq.s32.totalorder %s15, 0
    %p70 = por %p68, %p69
    %p71 = scmp.ne.s32.totalorder %s63, %s65
    %p72 = scmp.eq.s32.totalorder %s20, 1
    %p73 = por %p71, %p72
    %p74 = scmp.ne.s32.totalorder %s65, %s66
    %p75 = scmp.eq.s32.totalorder %s20, 0
    %p76 = por %p74, %p75
    %p77 = scmp.ne.s32.totalorder %s65, %s66
    %p78 = scmp.eq.s32.totalorder %s21, 1
    %p79 = por %p77, %p78
    %p81 = scmp.ne.s32.totalorder %s66, %s80
    %p82 = scmp.eq.s32.totalorder %s21, 0
    %p83 = por %p81, %p82
    %s84 = ssub.s32 %s23, %s30
    %p85 = scmp.eq.s32.totalorder %s84, 0
    %s87 = sadd.s32 %s86, 1
    %s88 = scalar_select %p85, %s86, %s87
    %p91 = pneg %p85
    %p92 = scmp.eq.s32.totalorder %s15, 1
    %p93 = por %p91, %p92
    %p94 = scmp.ne.s32.totalorder %s86, %s89
    %p95 = scmp.eq.s32.totalorder %s15, 0
    %p96 = por %p94, %p95
    %p97 = scmp.ne.s32.totalorder %s86, %s89
    %p98 = scmp.eq.s32.totalorder %s20, 1
    %p99 = por %p97, %p98
    %p100 = scmp.ne.s32.totalorder %s89, %s90
    %p101 = scmp.eq.s32.totalorder %s20, 0
    %p102 = por %p100, %p101
    %p103 = scmp.ne.s32.totalorder %s89, %s90
    %p104 = scmp.eq.s32.totalorder %s21, 1
    %p105 = por %p103, %p104
    %p107 = scmp.ne.s32.totalorder %s90, %s106
    %p108 = scmp.eq.s32.totalorder %s21, 0
    %p109 = por %p107, %p108
    %s110 = ssub.s32 %s22, %s34
    %s111 = ssub.s32 %s23, %s30
    %s112 = sor.u32 %s110, %s111
    %p113 = scmp.eq.s32.totalorder %s112, 0
    %s115 = sadd.s32 %s114, 1
    %s116 = scalar_select %p113, %s114, %s115
    %p119 = pneg %p113
    %p120 = scmp.eq.s32.totalorder %s15, 1
    %p121 = por %p119, %p120
    %p122 = scmp.ne.s32.totalorder %s114, %s117
    %p123 = scmp.eq.s32.totalorder %s15, 0
    %p124 = por %p122, %p123
    %p125 = scmp.ne.s32.totalorder %s114, %s117
    %p126 = scmp.eq.s32.totalorder %s20, 1
    %p127 = por %p125, %p126
    %p128 = scmp.ne.s32.totalorder %s117, %s118
    %p129 = scmp.eq.s32.totalorder %s20, 0
    %p130 = por %p128, %p129
    %p131 = scmp.ne.s32.totalorder %s117, %s118
    %p132 = scmp.eq.s32.totalorder %s21, 1
    %p133 = por %p131, %p132
    %p135 = scmp.ne.s32.totalorder %s118, %s134
    %p136 = scmp.eq.s32.totalorder %s21, 0
    %p137 = por %p135, %p136
    %p138 = scmp.le.s32.totalorder 1, %s15
    %p139 = scmp.lt.s32.totalorder %s15, 3
    %p140 = pnand %p138, %p139
    %p141 = pneg %p140
    // Predicated region
    $region9: #{patch_embedding_forward.2} parent=5 // pred_check
      _
    $region10: #{patch_embedding_forward.2} parent=5 // pred_check_branch
      %143 = sbr.rel (%p140) target = $region12
    $region11: #{patch_embedding_forward.2} parent=5 // pred_region
      %s144 = ssub.s32 %s15, 1
      // Predicated region
      $region13: #{patch_embedding_forward.2} parent=11 // pred_check
        %p145 = pneg %p76
      $region14: #{patch_embedding_forward.2} parent=11 // pred_check_branch
        %147 = sbr.rel (%p145) target = $region16
      $region15: #{patch_embedding_forward.2} parent=11 // pred_region
        _
      $region16: #{patch_embedding_forward.2} parent=11 // pred_fallthru
        _
      // Predicated region
      $region17: #{patch_embedding_forward.2} parent=11 // pred_check
        %p148 = pneg %p102
      $region18: #{patch_embedding_forward.2} parent=11 // pred_check_branch
        %150 = sbr.rel (%p148) target = $region20
      $region19: #{patch_embedding_forward.2} parent=11 // pred_region
        %s151 = smul.u32 4, %s25
        %p152 = scmp.lt.s32.totalorder %s151, 3
        %s153 = scalar_select %p152, %s151, 3
        %s154 = smul.addr %s153, 4
        %s155 = scalar_lea.vmem %s1, %s154
        %s156 = smul.u32 4, %s25
      $region20: #{patch_embedding_forward.2} parent=11 // pred_fallthru
        _
    $region12: #{patch_embedding_forward.2} parent=5 // pred_fallthru
      _
    %p157 = scmp.lt.s32.totalorder %s15, 2
    // Predicated region
    $region21: #{patch_embedding_forward.2} parent=5 // pred_check
      %p158 = pneg %p157
    $region22: #{patch_embedding_forward.2} parent=5 // pred_check_branch
      %160 = sbr.rel (%p158) target = $region24
    $region23: #{patch_embedding_forward.2} parent=5 // pred_region
      // Predicated region
      $region25: #{patch_embedding_forward.2} parent=23 // pred_check
        %p161 = pneg %p49
      $region26: #{patch_embedding_forward.2} parent=23 // pred_check_branch
        %163 = sbr.rel (%p161) target = $region28
      $region27: #{patch_embedding_forward.2} parent=23 // pred_region
        %s164 = smul.u32 4, %s23
        %s165 = ssub.s32 1, %s164
        %p166 = scmp.gt.s32.totalorder %s165, 0
        %s167 = scalar_select %p166, %s165, 0
        %s168 = ssub.s32 3, %s164
        %s169 = ssub.s32 %s168, %s167
        %s170 = smul.u32 64, %s169
        %p171 = scmp.lt.s32.totalorder %s22, 1
        %s172 = scalar_select %p171, %s22, 1
        %s173 = ssub.s32 %s164, 1
        %p174 = scmp.lt.s32.totalorder %s173, 1
        %s175 = scalar_select %p174, %s173, 1
        %s176 = smul.addr %s172, 2
        %s177 = sadd.s32 %s175, %s176
        %s178 = smul.addr %s177, 4
        %s179 = scalar_lea.vmem %s2, %s178
        %s180 = smul.u32 4, %s23
        %s181 = ssub.s32 1, %s180
        %p182 = scmp.gt.s32.totalorder %s181, 0
        %s183 = scalar_select %p182, %s181, 0
        %s184 = ssub.s32 3, %s180
        %s185 = ssub.s32 %s184, %s183
        %s186 = smul.u32 64, %s185
      $region28: #{patch_embedding_forward.2} parent=23 // pred_fallthru
        _
    $region24: #{patch_embedding_forward.2} parent=5 // pred_fallthru
      _
    %p187 = scmp.le.s32.totalorder 1, %s15
    %p188 = scmp.lt.s32.totalorder %s15, 3
    %p189 = pnand %p187, %p188
    %p190 = pneg %p189
    // Predicated region
    $region29: #{patch_embedding_forward.2} parent=5 // pred_check
      _
    $region30: #{patch_embedding_forward.2} parent=5 // pred_check_branch
      %192 = sbr.rel (%p189) target = $region32
    $region31: #{patch_embedding_forward.2} parent=5 // pred_region
      #allocation7 [shape = 'u8[8192]{0}', space=vmem, size = 0x2000, dematerialized = true, scoped, tag = 'FusionAdapter Buffer %fusion.1 = bf16[2,32,128]{2,1,0:T(8,128)(2,1)} fusion(%param_2.1, %param_3), kind=kLoop, calls=%fused_computation.2.clone, metadata={op_name="jit(patch_embedding_forward)/jit(_pad)/pad" stack_frame_id=9}']
      %s193 = ssub.s32 %s15, 1
      %s194 = smul.u32 4, %s25
      %s195 = ssub.s32 1, %s194
      %p196 = scmp.gt.s32.totalorder %s195, 0
      %s197 = scalar_select %p196, %s195, 0
      %s198 = ssub.s32 3, %s194
      %s199 = ssub.s32 %s198, %s197
      %s200 = smul.u32 64, %s199
      %p201 = scmp.lt.s32.totalorder %s24, 1
      %s202 = scalar_select %p201, %s24, 1
      %s203 = ssub.s32 %s194, 1
      %p204 = scmp.lt.s32.totalorder %s203, 1
      %s205 = scalar_select %p204, %s203, 1
      %s206 = smul.addr %s202, 2
      %s207 = sadd.s32 %s205, %s206
      %s208 = smul.addr %s207, 4
      %s209 = scalar_lea.vmem %s2, %s208
      %p210 = pneg %p55
      %p211 = pneg %p52
      %p212 = pneg %p76
      %p213 = pneg %p73
      %s214 = smul.u32 4, %s25
      %p215 = scmp.lt.s32.totalorder %s214, 3
      %s216 = scalar_select %p215, %s214, 3
      %s217 = smul.addr %s216, 4
      %s218 = scalar_lea.vmem %s1, %s217
      %p219 = pneg %p102
      %p220 = pneg %p99
      %p221 = pneg %p130
      %p222 = pneg %p127
      %s223 = smul.u32 4, %s25
      %p224 = scmp.lt.s32.totalorder %s24, 1
      %s225 = scalar_select %p224, %s24, 1
      %p226 = scmp.lt.s32.totalorder %s223, 3
      %s227 = scalar_select %p226, %s223, 3
      %s228 = smul.addr %s225, 4
      %s229 = sadd.s32 %s227, %s228
      %s230 = smul.addr %s229, 4
      %s231 = scalar_lea.vmem %s4, %s230
      %s232 = smul.u32 4, %s25
      %s233 = ssub.s32 1, %s232
      %p234 = scmp.gt.s32.totalorder %s233, 0
      %s235 = scalar_select %p234, %s233, 0
      %s236 = ssub.s32 3, %s232
      %s237 = ssub.s32 %s236, %s235
      %s238 = smul.u32 64, %s237
      %p239 = scmp.lt.s32.totalorder %s24, 1
      %s240 = scalar_select %p239, %s24, 1
      %s241 = ssub.s32 %s232, 1
      %p242 = scmp.lt.s32.totalorder %s241, 1
      %s243 = scalar_select %p242, %s241, 1
      %s244 = smul.addr %s240, 2
      %s245 = sadd.s32 %s243, %s244
      %s246 = smul.addr %s245, 4
      %s247 = scalar_lea.vmem %s2, %s246
      %s248 = smul.u32 4, %s25
      %s249 = ssub.s32 1, %s248
      %p250 = scmp.gt.s32.totalorder %s249, 0
      %s251 = scalar_select %p250, %s249, 0
      %s252 = ssub.s32 3, %s248
      %s253 = ssub.s32 %s252, %s251
      %s254 = smul.u32 64, %s253
      %s255 = smul.u32 4, %s25
      %p256 = scmp.lt.s32.totalorder %s255, 3
      %s257 = scalar_select %p256, %s255, 3
      %s258 = smul.addr %s257, 4
      %s259 = scalar_lea.vmem %s1, %s258
      %s260 = smul.u32 4, %s25
      %s261 = smul.u32 4, %s25
      %p262 = scmp.lt.s32.totalorder %s24, 1
      %s263 = scalar_select %p262, %s24, 1
      %p264 = scmp.lt.s32.totalorder %s261, 3
      %s265 = scalar_select %p264, %s261, 3
      %s266 = smul.addr %s263, 4
      %s267 = sadd.s32 %s265, %s266
      %s268 = smul.addr %s267, 4
      %s269 = scalar_lea.vmem %s4, %s268
      %s270 = smul.u32 4, %s25
      %s271 = ssub.s32 %s248, 1
      %s272 = ssub.s32 2, %s248
      %s273 = sor.u32 %s271, %s272
      %p274 = scmp.lt.s32.totalorder %s273, 0
      %s275 = scalar_select %p274, 0, 255
      %s276 = sshrl.u32 %s275, 1
      %s277 = sor.u32 %s275, %s276
      %s278 = sand.u32 %s277, 85
      %s279 = sshrl.u32 %s278, 1
      %s280 = sor.u32 %s278, %s279
      %s281 = sand.u32 51, %s280
      %s282 = sshrl.u32 %s281, 2
      %s283 = sor.u32 %s281, %s282
      %s284 = sand.u32 15, %s283
      %v285 = vld [vmem:[%s247] sm:%s284]
      %v286 = vunpack.c.l.bf16 %v285
      %v287 = vunpack.c.h.bf16 %v285
      %s288 = ssub.s32 %s248, 1
      %s289 = ssub.s32 2, %s248
      %s290 = sor.u32 %s288, %s289
      %v291 = vstv %s290
      %vm292 = vcmp.lt.s32.totalorder %v291, 0
      %v293 = vsel %vm292, %v10, %v286
      %v294 = vlaneseq
      %v295 = vand.u32 %v294, 127
      %vm297 = vcmp.lt.s32.totalorder %v295, 64
      %v298 = vsel %vm297, %v293, %v10
      %s299 = scalar_lea.vmem %s247, 4
      %s300 = sadd.s32 %s248, 1
      %s301 = ssub.s32 %s300, 1
      %s302 = ssub.s32 2, %s300
      %s303 = sor.u32 %s301, %s302
      %p304 = scmp.lt.s32.totalorder %s303, 0
      %s305 = scalar_select %p304, 0, 255
      %s306 = sshrl.u32 %s305, 1
      %s307 = sor.u32 %s305, %s306
      %s308 = sand.u32 %s307, 85
      %s309 = sshrl.u32 %s308, 1
      %s310 = sor.u32 %s308, %s309
      %s311 = sand.u32 51, %s310
      %s312 = sshrl.u32 %s311, 2
      %s313 = sor.u32 %s311, %s312
      %s314 = sand.u32 15, %s313
      %v315 = vld [vmem:[%s299] sm:%s314]
      %v316 = vunpack.c.l.bf16 %v315
      %v317 = vunpack.c.h.bf16 %v315
      %s318 = sadd.s32 %s248, 1
      %s319 = ssub.s32 %s318, 1
      %s320 = ssub.s32 2, %s318
      %s321 = sor.u32 %s319, %s320
      %v322 = vstv %s321
      %vm323 = vcmp.lt.s32.totalorder %v322, 0
      %v324 = vsel %vm323, %v10, %v316
      %v325 = vlaneseq
      %v326 = vand.u32 %v325, 127
      %vm328 = vcmp.lt.s32.totalorder %v326, 64
      %v329 = vsel %vm328, %v324, %v10
      %vm330 = vcmask 1046528
      %v331 = vsel %vm330, %v329, %v298
      %v332 = vrot.slane %v331, 7
      %v333 = vpack.c.bf16 0.0, %v332
      %335 = vst [vmem:[#allocation7] sm:$0xf] %v333
      %s336 = scalar_lea.vmem %s247, 8
      %s337 = sadd.s32 %s248, 2
      %s338 = ssub.s32 %s337, 1
      %s339 = ssub.s32 2, %s337
      %s340 = sor.u32 %s338, %s339
      %p341 = scmp.lt.s32.totalorder %s340, 0
      %s342 = scalar_select %p341, 0, 255
      %s343 = sshrl.u32 %s342, 1
      %s344 = sor.u32 %s342, %s343
      %s345 = sand.u32 %s344, 85
      %s346 = sshrl.u32 %s345, 1
      %s347 = sor.u32 %s345, %s346
      %s348 = sand.u32 51, %s347
      %s349 = sshrl.u32 %s348, 2
      %s350 = sor.u32 %s348, %s349
      %s351 = sand.u32 15, %s350
      %v352 = vld [vmem:[%s336] sm:%s351]
      %v353 = vunpack.c.l.bf16 %v352
      %v354 = vunpack.c.h.bf16 %v352
      %s355 = sadd.s32 %s248, 2
      %s356 = ssub.s32 %s355, 1
      %s357 = ssub.s32 2, %s355
      %s358 = sor.u32 %s356, %s357
      %v359 = vstv %s358
      %vm360 = vcmp.lt.s32.totalorder %v359, 0
      %v361 = vsel %vm360, %v10, %v353
      %v362 = vlaneseq
      %v363 = vand.u32 %v362, 127
      %vm365 = vcmp.lt.s32.totalorder %v363, 64
      %v366 = vsel %vm365, %v361, %v10
      %vm367 = vcmask 1046528
      %v368 = vsel %vm367, %v366, %v329
      %v369 = vrot.slane %v368, 7
      %s370 = scalar_lea.vmem [#allocation7], 4
      %v371 = vpack.c.bf16 0.0, %v369
      %373 = vst [vmem:[%s370] sm:$0xf] %v371
      %vm374 = vcmask 1046528
      %v375 = vsel %vm374, %v10, %v366
      %v376 = vrot.slane %v375, 7
      %s377 = scalar_lea.vmem [#allocation7], 8
      %v378 = vpack.c.bf16 0.0, %v376
      %380 = vst [vmem:[%s377] sm:$0xf] %v378
      %s381 = scalar_lea.vmem [#allocation7], 12
      %v382 = vpack.c.bf16 0.0, %v10
      %384 = vst [vmem:[%s381] sm:$0xf] %v382
      %v386 = vld [vmem:[#allocation7] sm:$0xf]
      %v387 = vld [vmem:[#allocation7 + $0x4] sm:$0xf]
      %v388 = vld [vmem:[#allocation7 + $0x8] sm:$0xf]
      %v389 = vld [vmem:[#allocation7 + $0xc] sm:$0xf]
      %v390 = vld [vmem:[%s0] sm:$0xf]
      %v391 = vld [vmem:[%s0 + $0x4] sm:$0xf]
      %v392 = vld [vmem:[%s0 + $0x8] sm:$0xf]
      %v393 = vld [vmem:[%s0 + $0xc] sm:$0xf]
      %v394 = vld [vmem:[%s0 + $0x10] sm:$0xf]
      %v395 = vld [vmem:[%s0 + $0x14] sm:$0xf]
      %v396 = vld [vmem:[%s0 + $0x18] sm:$0xf]
      %v397 = vld [vmem:[%s0 + $0x1c] sm:$0xf]
      %v398 = vld [vmem:[%s0 + $0x20] sm:$0xf]
      %v399 = vld [vmem:[%s0 + $0x24] sm:$0xf]
      %v400 = vld [vmem:[%s0 + $0x28] sm:$0xf]
      %v401 = vld [vmem:[%s0 + $0x2c] sm:$0xf]
      %v402 = vld [vmem:[%s0 + $0x30] sm:$0xf]
      %v403 = vld [vmem:[%s0 + $0x34] sm:$0xf]
      %v404 = vld [vmem:[%s0 + $0x38] sm:$0xf]
      %v405 = vld [vmem:[%s0 + $0x3c] sm:$0xf]
      %v406 = vld [vmem:[%s259] sm:$0xf]
      %v407 = vld [vmem:[%s259 + $0x4] sm:$0xf]
      %v408 = vld [vmem:[%s259 + $0x8] sm:$0xf]
      %v409 = vld [vmem:[%s259 + $0xc] sm:$0xf]
      %v410 = vunpack.c.l.bf16 %v406
      %v411 = vunpack.c.l.bf16 %v407
      %v412 = vunpack.c.l.bf16 %v408
      %v413 = vunpack.c.l.bf16 %v409
      %v418 = vunpack.c.l.b16 %v386
      %v419 = vunpack.c.l.b16 %v387
      %v420 = vunpack.c.l.b16 %v388
      %v421 = vunpack.c.l.b16 %v389
      %v422 = vpack.c.b16 %v419, %v418
      %v423 = vpack.c.b16 %v421, %v420
      %v442 = vunpack.c.l.b16 %v390
      %v443 = vunpack.c.l.b16 %v391
      %v444 = vunpack.c.l.b16 %v392
      %v445 = vunpack.c.l.b16 %v393
      %v446 = vunpack.c.l.b16 %v394
      %v447 = vunpack.c.l.b16 %v395
      %v448 = vunpack.c.l.b16 %v396
      %v449 = vunpack.c.l.b16 %v397
      %v450 = vunpack.c.l.b16 %v398
      %v451 = vunpack.c.l.b16 %v399
      %v452 = vunpack.c.l.b16 %v400
      %v453 = vunpack.c.l.b16 %v401
      %v454 = vunpack.c.l.b16 %v402
      %v455 = vunpack.c.l.b16 %v403
      %v456 = vunpack.c.l.b16 %v404
      %v457 = vunpack.c.l.b16 %v405
      %v458 = vpack.c.b16 %v443, %v442
      %v459 = vpack.c.b16 %v445, %v444
      %v460 = vpack.c.b16 %v447, %v446
      %v461 = vpack.c.b16 %v449, %v448
      %v462 = vpack.c.b16 %v451, %v450
      %v463 = vpack.c.b16 %v453, %v452
      %v464 = vpack.c.b16 %v455, %v454
      %v465 = vpack.c.b16 %v457, %v456
      %474 = vmatprep.subr.bf16.mxu0 0
      %475 = vmatpush1.bf16.msra.mxu0 %v458
      %476 = vmatprep.subr.bf16.mxu0 0
      %477 = vmatpush1.bf16.msra.mxu0 %v459
      %478 = vmatprep.subr.bf16.mxu0 0
      %479 = vmatpush1.bf16.msra.mxu0 %v460
      %480 = vmatprep.subr.bf16.mxu0 0
      %481 = vmatpush1.bf16.msra.mxu0 %v461
      %482 = vmatprep.subr.bf16.mxu0 0
      %483 = vmatpush1.bf16.msra.mxu0 %v462
      %484 = vmatprep.subr.bf16.mxu0 0
      %485 = vmatpush1.bf16.msra.mxu0 %v463
      %486 = vmatprep.subr.bf16.mxu0 0
      %487 = vmatpush1.bf16.msra.mxu0 %v464
      %488 = vmatprep.subr.bf16.mxu0 0
      %489 = vmatpush1.bf16.msra.mxu0 %v465
      %490 = vmatprep.subr.bf16.mxu0 0
      %491 = vmatpush1.bf16.msra.mxu0 0
      %492 = vmatprep.subr.bf16.mxu0 0
      %493 = vmatpush1.bf16.msra.mxu0 0
      %494 = vmatprep.subr.bf16.mxu0 0
      %495 = vmatpush1.bf16.msra.mxu0 0
      %496 = vmatprep.subr.bf16.mxu0 0
      %497 = vmatpush1.bf16.msra.mxu0 0
      %498 = vmatprep.subr.bf16.mxu0 0
      %499 = vmatpush1.bf16.msra.mxu0 0
      %500 = vmatprep.subr.bf16.mxu0 0
      %501 = vmatpush1.bf16.msra.mxu0 0
      %502 = vmatprep.subr.bf16.mxu0 0
      %503 = vmatpush1.bf16.msra.mxu0 0
      %504 = vmatprep.subr.bf16.mxu0 0
      %505 = vmatpush1.bf16.msra.mxu0 0
      %506 = vmatprep.mubr.bf16.mxu0 0
      %507 = vmatmul.mubr.bf16.gmra.mrb[0].mxu0 %v422
      %v508 = vpop.f32.mrb[0].mxu0
      %v509 = vadd.f32 %v410, %v508
      %v510 = vpop.f32.mrb[0].mxu0
      %v511 = vpop.f32.mrb[0].mxu0
      %v512 = vadd.f32 %v411, %v511
      %v513 = vpop.f32.mrb[0].mxu0
      %514 = vmatprep.mubr.bf16.mxu0 0
      %515 = vmatmul.mubr.bf16.gmra.mrb[0].mxu0 %v423
      %v516 = vpop.f32.mrb[0].mxu0
      %v517 = vadd.f32 %v412, %v516
      %v518 = vpop.f32.mrb[0].mxu0
      %v519 = vpop.f32.mrb[0].mxu0
      %v520 = vadd.f32 %v413, %v519
      %v521 = vpop.f32.mrb[0].mxu0
      %522 = vdwg.mxu0
      %v523 = vpack.c.bf16 %v512, %v509
      %v524 = vpack.c.bf16 %v520, %v517
      %v527 = vunpack.c.l.b16 %v523
      %v528 = vunpack.c.h.b16 %v523
      %v529 = vunpack.c.l.b16 %v524
      %v530 = vunpack.c.h.b16 %v524
      %v531 = vpack.c.b16 %v527, %v527
      %v532 = vpack.c.b16 %v528, %v528
      %v533 = vpack.c.b16 %v529, %v529
      %v534 = vpack.c.b16 %v530, %v530
      %539 = vst [vmem:[%s269] sm:$0xf] %v531
      %540 = vst [vmem:[%s269 + $0x4] sm:$0xf] %v532
      %541 = vst [vmem:[%s269 + $0x8] sm:$0xf] %v533
      %542 = vst [vmem:[%s269 + $0xc] sm:$0xf] %v534
      %s543 = smul.u32 4, %s25
      %p544 = scmp.lt.s32.totalorder %s24, 1
      %s545 = scalar_select %p544, %s24, 1
      %p546 = scmp.lt.s32.totalorder %s543, 3
      %s547 = scalar_select %p546, %s543, 3
      %s548 = smul.addr %s545, 4
      %s549 = sadd.s32 %s547, %s548
      %s550 = smul.addr %s549, 4
      %s551 = scalar_lea.vmem %s4, %s550
      // Predicated region
      $region33: #{patch_embedding_forward.2} parent=31 // pred_check
        %p552 = pneg %p127
      $region34: #{patch_embedding_forward.2} parent=31 // pred_check_branch
        %554 = sbr.rel (%p552) target = $region36
      $region35: #{patch_embedding_forward.2} parent=31 // pred_region
        %s555 = smul.u32 4, %s25
      $region36: #{patch_embedding_forward.2} parent=31 // pred_fallthru
        _
    $region32: #{patch_embedding_forward.2} parent=5 // pred_fallthru
      _
    %p556 = scmp.le.s32.totalorder 2, %s15
    // Predicated region
    $region37: #{patch_embedding_forward.2} parent=5 // pred_check
      %p557 = pneg %p556
    $region38: #{patch_embedding_forward.2} parent=5 // pred_check_branch
      %559 = sbr.rel (%p557) target = $region40
    $region39: #{patch_embedding_forward.2} parent=5 // pred_region
      %s560 = ssub.s32 %s15, 2
      // Predicated region
      $region41: #{patch_embedding_forward.2} parent=39 // pred_check
        %p561 = pneg %p133
      $region42: #{patch_embedding_forward.2} parent=39 // pred_check_branch
        %563 = sbr.rel (%p561) target = $region44
      $region43: #{patch_embedding_forward.2} parent=39 // pred_region
        %s564 = smul.u32 4, %s27
        %p565 = scmp.lt.s32.totalorder %s26, 1
        %s566 = scalar_select %p565, %s26, 1
        %p567 = scmp.lt.s32.totalorder %s564, 3
        %s568 = scalar_select %p567, %s564, 3
        %s569 = smul.addr %s566, 4
        %s570 = sadd.s32 %s568, %s569
        %s571 = smul.addr %s570, 4
        %s572 = scalar_lea.vmem %s4, %s571
      $region44: #{patch_embedding_forward.2} parent=39 // pred_fallthru
        _
    $region40: #{patch_embedding_forward.2} parent=5 // pred_fallthru
      _
  $region6: #{patch_embedding_forward.2} parent=0 // loop_footer
    %s19 = sadd.s32 1, %s15
  $region7: #{patch_embedding_forward.2} parent=0 // loop_footer_branch
    %14 = sbr.rel target = $region3
  $region8: #{patch_embedding_forward.2} parent=0 // loop_exit
    _

</llo_original>
